<compile_context>
chip_gen: v7x
topology: tpu7x:2x2x1
jax: 0.10.0
libtpu: 0.0.40
codegen_flags: <defaults>
</compile_context>

<pallas_src>
import jax
import jax.numpy as jnp
from jax.experimental import pallas as pl
from jax.experimental.pallas import tpu as pltpu

LN_EPS = 1e-5
_INV_SQRT2 = 0.7071067811865476


def _round_up(x, m):
    return ((x + m - 1) // m) * m


def _ln_gelu(h, gamma, beta):
    """Fused one-pass LayerNorm (last dim) followed by exact erf-based GELU."""
    mu = jnp.mean(h, axis=-1, keepdims=True)
    ms = jnp.mean(h * h, axis=-1, keepdims=True)
    var = ms - mu * mu
    hn = (h - mu) * jax.lax.rsqrt(var + LN_EPS)
    hn = hn * gamma + beta
    # exact GELU, matching torch.nn.GELU() default
    return 0.5 * hn * (1.0 + jax.lax.erf(hn * jnp.float32(_INV_SQRT2)))


def mlp_invdyn_kernel(x_ref, w1_ref, w2_ref, w3_ref, w4_ref, vec_ref, b4_ref, o_ref):
    # vec_ref rows: [b1, g1, be1, b2, g2, be2, b3, g3, be3, <zero padding...>]
    x = x_ref[...]

    # Layer 1: Linear(2*o_dim -> H) + LN + GELU
    h = jnp.dot(x, w1_ref[...], preferred_element_type=jnp.float32)
    h = _ln_gelu(h + vec_ref[0:1, :], vec_ref[1:2, :], vec_ref[2:3, :])
    # TODO(synk): nn.Dropout(p) omitted — identity at inference (eval) time.

    # Layer 2: Linear(H -> H) + LN + GELU
    h = jnp.dot(h, w2_ref[...], preferred_element_type=jnp.float32)
    h = _ln_gelu(h + vec_ref[3:4, :], vec_ref[4:5, :], vec_ref[5:6, :])

    # Layer 3: Linear(H -> H) + LN + GELU
    h = jnp.dot(h, w3_ref[...], preferred_element_type=jnp.float32)
    h = _ln_gelu(h + vec_ref[6:7, :], vec_ref[7:8, :], vec_ref[8:9, :])

    # Output head: Linear(H -> a_pad) + Tanh  (lane-dense padded output)
    out = jnp.dot(h, w4_ref[...], preferred_element_type=jnp.float32) + b4_ref[...]
    o_ref[...] = jnp.tanh(out).astype(o_ref.dtype)


def mlp_inv_dynamic(o, params, *, block_m=1024):
    """Pallas wrapper. o: [B, 2*o_dim] float32. Returns [B, a_dim] float32."""
    o = o.astype(jnp.float32)
    B, in_dim = o.shape
    H = params["w1"].shape[1]
    a_dim = params["w4"].shape[1]

    # ---- batch tiling: clamp block_m to the 8-padded batch, pad remainder ----
    block_m = max(8, _round_up(block_m, 8))
    block_m = min(block_m, _round_up(B, 8))
    B_pad = _round_up(B, block_m)
    if B_pad != B:
        o = jnp.pad(o, ((0, B_pad - B), (0, 0)))

    # ---- lane-dense output head: pad a_dim up to a multiple of 128 ----
    a_pad = _round_up(a_dim, 128)
    w4p = jnp.pad(params["w4"], ((0, 0), (0, a_pad - a_dim)))
    b4p = jnp.pad(params["b4"], ((0, 0), (0, a_pad - a_dim)))

    # ---- pack the 9 tiny (1,H) vectors into one [16,H] block ----
    vec_names = ("b1", "g1", "be1", "b2", "g2", "be2", "b3", "g3", "be3")
    vecs = jnp.concatenate([params[k] for k in vec_names], axis=0)        # (9, H)
    vecs = jnp.pad(vecs, ((0, 16 - vecs.shape[0]), (0, 0)))               # (16, H)

    grid = (B_pad // block_m,)

    # ---- scoped-VMEM sizing: tile I/O (double-buffered) + resident params
    #      + live fp32 intermediates inside the body, with 2x margin ----
    f32 = 4
    est = (
        2 * block_m * in_dim * f32
        + 2 * block_m * a_pad * f32
        + 2 * (in_dim * H + 2 * H * H + H * a_pad + 16 * H + a_pad) * f32
        + 8 * block_m * H * f32
    )
    vmem_limit = int(min(max(2 * est, 16 * 1024 * 1024), 48 * 1024 * 1024))

    in_specs = [
        pl.BlockSpec((block_m, in_dim), lambda i: (i, 0)),   # x tile
        pl.BlockSpec((in_dim, H), lambda i: (0, 0)),         # w1 (resident)
        pl.BlockSpec((H, H), lambda i: (0, 0)),              # w2 (resident)
        pl.BlockSpec((H, H), lambda i: (0, 0)),              # w3 (resident)
        pl.BlockSpec((H, a_pad), lambda i: (0, 0)),          # w4 padded (resident)
        pl.BlockSpec((16, H), lambda i: (0, 0)),             # packed b/gamma/beta
        pl.BlockSpec((1, a_pad), lambda i: (0, 0)),          # b4 padded
    ]
    out_specs = pl.BlockSpec((block_m, a_pad), lambda i: (i, 0))

    out = pl.pallas_call(
        mlp_invdyn_kernel,
        out_shape=jax.ShapeDtypeStruct((B_pad, a_pad), jnp.float32),
        grid_spec=pltpu.PrefetchScalarGridSpec(
            num_scalar_prefetch=0,
            grid=grid,
            in_specs=in_specs,
            out_specs=out_specs,
        ),
        compiler_params=pltpu.CompilerParams(
            dimension_semantics=("parallel",),
            vmem_limit_bytes=vmem_limit,
        ),
    )(o, params["w1"], params["w2"], params["w3"], w4p, vecs, b4p)

    return out[:B, :a_dim]


def init_params(key, o_dim, a_dim, hidden_dim):
    """Deterministic init matching the torch module: kaiming_normal_ (relu gain,
    fan_in) for Linear weights, zeros for biases, LayerNorm gamma=1 / beta=0."""
    in_dim = 2 * o_dim
    keys = jax.random.split(key, 4)

    def kaiming(k, fan_in, fan_out):
        std = jnp.sqrt(2.0 / fan_in)
        # torch weight is [out, in]; we store [in, out]
        return (jax.random.normal(k, (fan_out, fan_in), jnp.float32) * std).T

    params = {
        "w1": kaiming(keys[0], in_dim, hidden_dim),
        "b1": jnp.zeros((1, hidden_dim), jnp.float32),
        "g1": jnp.ones((1, hidden_dim), jnp.float32),
        "be1": jnp.zeros((1, hidden_dim), jnp.float32),
        "w2": kaiming(keys[1], hidden_dim, hidden_dim),
        "b2": jnp.zeros((1, hidden_dim), jnp.float32),
        "g2": jnp.ones((1, hidden_dim), jnp.float32),
        "be2": jnp.zeros((1, hidden_dim), jnp.float32),
        "w3": kaiming(keys[2], hidden_dim, hidden_dim),
        "b3": jnp.zeros((1, hidden_dim), jnp.float32),
        "g3": jnp.ones((1, hidden_dim), jnp.float32),
        "be3": jnp.zeros((1, hidden_dim), jnp.float32),
        "w4": kaiming(keys[3], hidden_dim, a_dim),
        "b4": jnp.zeros((1, a_dim), jnp.float32),
    }
    return params


def reference_forward(o, p):
    """Pure-JAX reference of the torch forward (eval mode)."""
    o = o.astype(jnp.float32)

    def ln_gelu(h, g, b):
        mu = jnp.mean(h, axis=-1, keepdims=True)
        var = jnp.mean((h - mu) ** 2, axis=-1, keepdims=True)
        h = (h - mu) / jnp.sqrt(var + LN_EPS) * g + b
        return jax.nn.gelu(h, approximate=False)

    h = ln_gelu(o @ p["w1"] + p["b1"], p["g1"], p["be1"])
    h = ln_gelu(h @ p["w2"] + p["b2"], p["g2"], p["be2"])
    h = ln_gelu(h @ p["w3"] + p["b3"], p["g3"], p["be3"])
    return jnp.tanh(h @ p["w4"] + p["b4"])


if __name__ == "__main__":
    o_dim = 8        # state dim  -> input is 2*o_dim = 16
    a_dim = 4        # action dim
    hidden_dim = 32  # small hidden size for the demo (512 in the real module)
    batch = 20       # deliberately not a multiple of 8: exercises pad + slice path

    key = jax.random.PRNGKey(0)
    k_param, k_x = jax.random.split(key)
    params = init_params(k_param, o_dim, a_dim, hidden_dim)
    o = jax.random.normal(k_x, (batch, 2 * o_dim), jnp.float32)

    out = mlp_inv_dynamic(o, params)
    out = jax.block_until_ready(out)

    ref = reference_forward(o, params)
    assert out.shape == (batch, a_dim)
    assert jnp.allclose(out, ref, atol=3e-5, rtol=1e-4), "mismatch vs. reference"

    print("KERNEL_OK")
</pallas_src>

<mosaic_0001>
module attributes {stable_mosaic.version = 11 : i64} {
  func.func @mlp_invdyn_kernel(%arg0: i32, %arg1: memref<24x16xf32, #tpu.memory_space<vmem>>, %arg2: memref<16x32xf32, #tpu.memory_space<vmem>>, %arg3: memref<32x32xf32, #tpu.memory_space<vmem>>, %arg4: memref<32x32xf32, #tpu.memory_space<vmem>>, %arg5: memref<32x128xf32, #tpu.memory_space<vmem>>, %arg6: memref<16x32xf32, #tpu.memory_space<vmem>>, %arg7: memref<1x128xf32, #tpu.memory_space<vmem>>, %arg8: memref<24x128xf32, #tpu.memory_space<vmem>>) attributes {dimension_semantics = [#tpu.dimension_semantics<parallel>], iteration_bounds = array<i64: 1>, scalar_prefetch = 0 : i64, scratch_operands = 0 : i64, tpu.core_type = #tpu.core_type<tc>, window_params = [{transform_indices = @transform_0, window_bounds = array<i64: 24, 16>}, {pipeline_mode = #tpu.pipeline_mode<synchronous>, transform_indices = @transform_1, window_bounds = array<i64: 16, 32>}, {pipeline_mode = #tpu.pipeline_mode<synchronous>, transform_indices = @transform_2, window_bounds = array<i64: 32, 32>}, {pipeline_mode = #tpu.pipeline_mode<synchronous>, transform_indices = @transform_3, window_bounds = array<i64: 32, 32>}, {pipeline_mode = #tpu.pipeline_mode<synchronous>, transform_indices = @transform_4, window_bounds = array<i64: 32, 128>}, {pipeline_mode = #tpu.pipeline_mode<synchronous>, transform_indices = @transform_5, window_bounds = array<i64: 16, 32>}, {pipeline_mode = #tpu.pipeline_mode<synchronous>, transform_indices = @transform_6, window_bounds = array<i64: 1, 128>}, {transform_indices = @transform_7, window_bounds = array<i64: 24, 128>}]} {
    %c0 = arith.constant 0 : index
    %c0_0 = arith.constant 0 : index
    %0 = vector.load %arg1[%c0, %c0_0] : memref<24x16xf32, #tpu.memory_space<vmem>>, vector<24x16xf32>
    %c0_1 = arith.constant 0 : index
    %c0_2 = arith.constant 0 : index
    %1 = vector.load %arg2[%c0_1, %c0_2] : memref<16x32xf32, #tpu.memory_space<vmem>>, vector<16x32xf32>
    %cst = arith.constant dense<0.000000e+00> : vector<24x32xf32>
    %2 = tpu.matmul %0, %1, %cst {dimension_numbers = #tpu.dot_dimension_numbers<[1], [0], [0], [1], [0, 0, 1, 1], [], []>} : vector<24x16xf32>, vector<16x32xf32>, vector<24x32xf32> -> vector<24x32xf32>
    %c0_3 = arith.constant 0 : index
    %c0_4 = arith.constant 0 : index
    %3 = vector.load %arg6[%c0_3, %c0_4] : memref<16x32xf32, #tpu.memory_space<vmem>>, vector<1x32xf32>
    %4 = vector.broadcast %3 : vector<1x32xf32> to vector<24x32xf32>
    %5 = arith.addf %2, %4 : vector<24x32xf32>
    %c1 = arith.constant 1 : index
    %c0_5 = arith.constant 0 : index
    %6 = vector.load %arg6[%c1, %c0_5] : memref<16x32xf32, #tpu.memory_space<vmem>>, vector<1x32xf32>
    %c2 = arith.constant 2 : index
    %c0_6 = arith.constant 0 : index
    %7 = vector.load %arg6[%c2, %c0_6] : memref<16x32xf32, #tpu.memory_space<vmem>>, vector<1x32xf32>
    %cst_7 = arith.constant dense<0.000000e+00> : vector<24xf32>
    %8 = vector.multi_reduction <add>, %5, %cst_7 [1] : vector<24x32xf32> to vector<24xf32>
    %9 = vector.shape_cast %8 : vector<24xf32> to vector<24x1xf32>
    %cst_8 = arith.constant 3.200000e+01 : f32
    %10 = vector.broadcast %cst_8 : f32 to vector<24x1xf32>
    %11 = arith.divf %9, %10 : vector<24x1xf32>
    %12 = arith.mulf %5, %5 : vector<24x32xf32>
    %cst_9 = arith.constant dense<0.000000e+00> : vector<24xf32>
    %13 = vector.multi_reduction <add>, %12, %cst_9 [1] : vector<24x32xf32> to vector<24xf32>
    %14 = vector.shape_cast %13 : vector<24xf32> to vector<24x1xf32>
    %cst_10 = arith.constant 3.200000e+01 : f32
    %15 = vector.broadcast %cst_10 : f32 to vector<24x1xf32>
    %16 = arith.divf %14, %15 : vector<24x1xf32>
    %17 = arith.mulf %11, %11 : vector<24x1xf32>
    %18 = arith.subf %16, %17 : vector<24x1xf32>
    %19 = vector.broadcast %11 : vector<24x1xf32> to vector<24x32xf32>
    %20 = arith.subf %5, %19 : vector<24x32xf32>
    %cst_11 = arith.constant 9.99999974E-6 : f32
    %21 = vector.broadcast %cst_11 : f32 to vector<24x1xf32>
    %22 = arith.addf %18, %21 : vector<24x1xf32>
    %23 = math.rsqrt %22 : vector<24x1xf32>
    %24 = vector.broadcast %23 : vector<24x1xf32> to vector<24x32xf32>
    %25 = arith.mulf %20, %24 : vector<24x32xf32>
    %26 = vector.broadcast %6 : vector<1x32xf32> to vector<24x32xf32>
    %27 = arith.mulf %25, %26 : vector<24x32xf32>
    %28 = vector.broadcast %7 : vector<1x32xf32> to vector<24x32xf32>
    %29 = arith.addf %27, %28 : vector<24x32xf32>
    %cst_12 = arith.constant 5.000000e-01 : f32
    %30 = vector.broadcast %cst_12 : f32 to vector<24x32xf32>
    %31 = arith.mulf %30, %29 : vector<24x32xf32>
    %cst_13 = arith.constant 0.707106769 : f32
    %32 = vector.broadcast %cst_13 : f32 to vector<24x32xf32>
    %33 = arith.mulf %29, %32 : vector<24x32xf32>
    %34 = math.erf %33 : vector<24x32xf32>
    %cst_14 = arith.constant 1.000000e+00 : f32
    %35 = vector.broadcast %cst_14 : f32 to vector<24x32xf32>
    %36 = arith.addf %35, %34 : vector<24x32xf32>
    %37 = arith.mulf %31, %36 : vector<24x32xf32>
    %c0_15 = arith.constant 0 : index
    %c0_16 = arith.constant 0 : index
    %38 = vector.load %arg3[%c0_15, %c0_16] : memref<32x32xf32, #tpu.memory_space<vmem>>, vector<32x32xf32>
    %cst_17 = arith.constant dense<0.000000e+00> : vector<24x32xf32>
    %39 = tpu.matmul %37, %38, %cst_17 {dimension_numbers = #tpu.dot_dimension_numbers<[1], [0], [0], [1], [0, 0, 1, 1], [], []>} : vector<24x32xf32>, vector<32x32xf32>, vector<24x32xf32> -> vector<24x32xf32>
    %c3 = arith.constant 3 : index
    %c0_18 = arith.constant 0 : index
    %40 = vector.load %arg6[%c3, %c0_18] : memref<16x32xf32, #tpu.memory_space<vmem>>, vector<1x32xf32>
    %41 = vector.broadcast %40 : vector<1x32xf32> to vector<24x32xf32>
    %42 = arith.addf %39, %41 : vector<24x32xf32>
    %c4 = arith.constant 4 : index
    %c0_19 = arith.constant 0 : index
    %43 = vector.load %arg6[%c4, %c0_19] : memref<16x32xf32, #tpu.memory_space<vmem>>, vector<1x32xf32>
    %c5 = arith.constant 5 : index
    %c0_20 = arith.constant 0 : index
    %44 = vector.load %arg6[%c5, %c0_20] : memref<16x32xf32, #tpu.memory_space<vmem>>, vector<1x32xf32>
    %cst_21 = arith.constant dense<0.000000e+00> : vector<24xf32>
    %45 = vector.multi_reduction <add>, %42, %cst_21 [1] : vector<24x32xf32> to vector<24xf32>
    %46 = vector.shape_cast %45 : vector<24xf32> to vector<24x1xf32>
    %cst_22 = arith.constant 3.200000e+01 : f32
    %47 = vector.broadcast %cst_22 : f32 to vector<24x1xf32>
    %48 = arith.divf %46, %47 : vector<24x1xf32>
    %49 = arith.mulf %42, %42 : vector<24x32xf32>
    %cst_23 = arith.constant dense<0.000000e+00> : vector<24xf32>
    %50 = vector.multi_reduction <add>, %49, %cst_23 [1] : vector<24x32xf32> to vector<24xf32>
    %51 = vector.shape_cast %50 : vector<24xf32> to vector<24x1xf32>
    %cst_24 = arith.constant 3.200000e+01 : f32
    %52 = vector.broadcast %cst_24 : f32 to vector<24x1xf32>
    %53 = arith.divf %51, %52 : vector<24x1xf32>
    %54 = arith.mulf %48, %48 : vector<24x1xf32>
    %55 = arith.subf %53, %54 : vector<24x1xf32>
    %56 = vector.broadcast %48 : vector<24x1xf32> to vector<24x32xf32>
    %57 = arith.subf %42, %56 : vector<24x32xf32>
    %cst_25 = arith.constant 9.99999974E-6 : f32
    %58 = vector.broadcast %cst_25 : f32 to vector<24x1xf32>
    %59 = arith.addf %55, %58 : vector<24x1xf32>
    %60 = math.rsqrt %59 : vector<24x1xf32>
    %61 = vector.broadcast %60 : vector<24x1xf32> to vector<24x32xf32>
    %62 = arith.mulf %57, %61 : vector<24x32xf32>
    %63 = vector.broadcast %43 : vector<1x32xf32> to vector<24x32xf32>
    %64 = arith.mulf %62, %63 : vector<24x32xf32>
    %65 = vector.broadcast %44 : vector<1x32xf32> to vector<24x32xf32>
    %66 = arith.addf %64, %65 : vector<24x32xf32>
    %cst_26 = arith.constant 5.000000e-01 : f32
    %67 = vector.broadcast %cst_26 : f32 to vector<24x32xf32>
    %68 = arith.mulf %67, %66 : vector<24x32xf32>
    %cst_27 = arith.constant 0.707106769 : f32
    %69 = vector.broadcast %cst_27 : f32 to vector<24x32xf32>
    %70 = arith.mulf %66, %69 : vector<24x32xf32>
    %71 = math.erf %70 : vector<24x32xf32>
    %cst_28 = arith.constant 1.000000e+00 : f32
    %72 = vector.broadcast %cst_28 : f32 to vector<24x32xf32>
    %73 = arith.addf %72, %71 : vector<24x32xf32>
    %74 = arith.mulf %68, %73 : vector<24x32xf32>
    %c0_29 = arith.constant 0 : index
    %c0_30 = arith.constant 0 : index
    %75 = vector.load %arg4[%c0_29, %c0_30] : memref<32x32xf32, #tpu.memory_space<vmem>>, vector<32x32xf32>
    %cst_31 = arith.constant dense<0.000000e+00> : vector<24x32xf32>
    %76 = tpu.matmul %74, %75, %cst_31 {dimension_numbers = #tpu.dot_dimension_numbers<[1], [0], [0], [1], [0, 0, 1, 1], [], []>} : vector<24x32xf32>, vector<32x32xf32>, vector<24x32xf32> -> vector<24x32xf32>
    %c6 = arith.constant 6 : index
    %c0_32 = arith.constant 0 : index
    %77 = vector.load %arg6[%c6, %c0_32] : memref<16x32xf32, #tpu.memory_space<vmem>>, vector<1x32xf32>
    %78 = vector.broadcast %77 : vector<1x32xf32> to vector<24x32xf32>
    %79 = arith.addf %76, %78 : vector<24x32xf32>
    %c7 = arith.constant 7 : index
    %c0_33 = arith.constant 0 : index
    %80 = vector.load %arg6[%c7, %c0_33] : memref<16x32xf32, #tpu.memory_space<vmem>>, vector<1x32xf32>
    %c8 = arith.constant 8 : index
    %c0_34 = arith.constant 0 : index
    %81 = vector.load %arg6[%c8, %c0_34] : memref<16x32xf32, #tpu.memory_space<vmem>>, vector<1x32xf32>
    %cst_35 = arith.constant dense<0.000000e+00> : vector<24xf32>
    %82 = vector.multi_reduction <add>, %79, %cst_35 [1] : vector<24x32xf32> to vector<24xf32>
    %83 = vector.shape_cast %82 : vector<24xf32> to vector<24x1xf32>
    %cst_36 = arith.constant 3.200000e+01 : f32
    %84 = vector.broadcast %cst_36 : f32 to vector<24x1xf32>
    %85 = arith.divf %83, %84 : vector<24x1xf32>
    %86 = arith.mulf %79, %79 : vector<24x32xf32>
    %cst_37 = arith.constant dense<0.000000e+00> : vector<24xf32>
    %87 = vector.multi_reduction <add>, %86, %cst_37 [1] : vector<24x32xf32> to vector<24xf32>
    %88 = vector.shape_cast %87 : vector<24xf32> to vector<24x1xf32>
    %cst_38 = arith.constant 3.200000e+01 : f32
    %89 = vector.broadcast %cst_38 : f32 to vector<24x1xf32>
    %90 = arith.divf %88, %89 : vector<24x1xf32>
    %91 = arith.mulf %85, %85 : vector<24x1xf32>
    %92 = arith.subf %90, %91 : vector<24x1xf32>
    %93 = vector.broadcast %85 : vector<24x1xf32> to vector<24x32xf32>
    %94 = arith.subf %79, %93 : vector<24x32xf32>
    %cst_39 = arith.constant 9.99999974E-6 : f32
    %95 = vector.broadcast %cst_39 : f32 to vector<24x1xf32>
    %96 = arith.addf %92, %95 : vector<24x1xf32>
    %97 = math.rsqrt %96 : vector<24x1xf32>
    %98 = vector.broadcast %97 : vector<24x1xf32> to vector<24x32xf32>
    %99 = arith.mulf %94, %98 : vector<24x32xf32>
    %100 = vector.broadcast %80 : vector<1x32xf32> to vector<24x32xf32>
    %101 = arith.mulf %99, %100 : vector<24x32xf32>
    %102 = vector.broadcast %81 : vector<1x32xf32> to vector<24x32xf32>
    %103 = arith.addf %101, %102 : vector<24x32xf32>
    %cst_40 = arith.constant 5.000000e-01 : f32
    %104 = vector.broadcast %cst_40 : f32 to vector<24x32xf32>
    %105 = arith.mulf %104, %103 : vector<24x32xf32>
    %cst_41 = arith.constant 0.707106769 : f32
    %106 = vector.broadcast %cst_41 : f32 to vector<24x32xf32>
    %107 = arith.mulf %103, %106 : vector<24x32xf32>
    %108 = math.erf %107 : vector<24x32xf32>
    %cst_42 = arith.constant 1.000000e+00 : f32
    %109 = vector.broadcast %cst_42 : f32 to vector<24x32xf32>
    %110 = arith.addf %109, %108 : vector<24x32xf32>
    %111 = arith.mulf %105, %110 : vector<24x32xf32>
    %c0_43 = arith.constant 0 : index
    %c0_44 = arith.constant 0 : index
    %112 = vector.load %arg5[%c0_43, %c0_44] : memref<32x128xf32, #tpu.memory_space<vmem>>, vector<32x128xf32>
    %cst_45 = arith.constant dense<0.000000e+00> : vector<24x128xf32>
    %113 = tpu.matmul %111, %112, %cst_45 {dimension_numbers = #tpu.dot_dimension_numbers<[1], [0], [0], [1], [0, 0, 1, 1], [], []>} : vector<24x32xf32>, vector<32x128xf32>, vector<24x128xf32> -> vector<24x128xf32>
    %c0_46 = arith.constant 0 : index
    %c0_47 = arith.constant 0 : index
    %114 = vector.load %arg7[%c0_46, %c0_47] : memref<1x128xf32, #tpu.memory_space<vmem>>, vector<1x128xf32>
    %115 = vector.broadcast %114 : vector<1x128xf32> to vector<24x128xf32>
    %116 = arith.addf %113, %115 : vector<24x128xf32>
    %117 = math.tanh %116 : vector<24x128xf32>
    %c0_48 = arith.constant 0 : index
    %c0_49 = arith.constant 0 : index
    %118 = vector.load %arg8[%c0_48, %c0_49] : memref<24x128xf32, #tpu.memory_space<vmem>>, vector<24x128xf32>
    tpu.vector_store %arg8[%c0_48, %c0_49], %117 {strides = array<i32>} : memref<24x128xf32, #tpu.memory_space<vmem>>, vector<24x128xf32>,
    return
  }
  func.func @transform_0(%arg0: i32) -> (i32, i32) {
    %c0_i32 = arith.constant 0 : i32
    %c0_i32_0 = arith.constant 0 : i32
    return %arg0, %c0_i32 : i32, i32
  }
  func.func @transform_1(%arg0: i32) -> (i32, i32) {
    %c0_i32 = arith.constant 0 : i32
    %c0_i32_0 = arith.constant 0 : i32
    %c0_i32_1 = arith.constant 0 : i32
    return %c0_i32, %c0_i32_0 : i32, i32
  }
  func.func @transform_2(%arg0: i32) -> (i32, i32) {
    %c0_i32 = arith.constant 0 : i32
    %c0_i32_0 = arith.constant 0 : i32
    %c0_i32_1 = arith.constant 0 : i32
    return %c0_i32, %c0_i32_0 : i32, i32
  }
  func.func @transform_3(%arg0: i32) -> (i32, i32) {
    %c0_i32 = arith.constant 0 : i32
    %c0_i32_0 = arith.constant 0 : i32
    %c0_i32_1 = arith.constant 0 : i32
    return %c0_i32, %c0_i32_0 : i32, i32
  }
  func.func @transform_4(%arg0: i32) -> (i32, i32) {
    %c0_i32 = arith.constant 0 : i32
    %c0_i32_0 = arith.constant 0 : i32
    %c0_i32_1 = arith.constant 0 : i32
    return %c0_i32, %c0_i32_0 : i32, i32
  }
  func.func @transform_5(%arg0: i32) -> (i32, i32) {
    %c0_i32 = arith.constant 0 : i32
    %c0_i32_0 = arith.constant 0 : i32
    %c0_i32_1 = arith.constant 0 : i32
    return %c0_i32, %c0_i32_0 : i32, i32
  }
  func.func @transform_6(%arg0: i32) -> (i32, i32) {
    %c0_i32 = arith.constant 0 : i32
    %c0_i32_0 = arith.constant 0 : i32
    %c0_i32_1 = arith.constant 0 : i32
    return %c0_i32, %c0_i32_0 : i32, i32
  }
  func.func @transform_7(%arg0: i32) -> (i32, i32) {
    %c0_i32 = arith.constant 0 : i32
    %c0_i32_0 = arith.constant 0 : i32
    return %arg0, %c0_i32 : i32, i32
  }
}

</mosaic_0001>

<llo_original>
// kernel: tpu_custom_call.1
$region0: #{tpu_custom_call.1}
  #allocation0 [shape = 'u32[]', space=smem, size = 0x4, offset = 0x4, fixed_abs, tag = 'smem constant byte address 0x4 - core index']
  #allocation1 [shape = 'u32[144,128]{1,0:T(1,128)}', space=vmem, size = 0x12000, scoped, tag = 'internal scratch']
  %s0 = inlined_call_operand.vmem [shape: f32[24,16], index: 0, kind: input, shape index: {}]
  %s1 = inlined_call_operand.hbm [shape: f32[16,32], index: 1, kind: input, shape index: {}]
  %s2 = inlined_call_operand.vmem [shape: f32[32,32], index: 2, kind: input, shape index: {}]
  %s3 = inlined_call_operand.hbm [shape: f32[32,32], index: 3, kind: input, shape index: {}]
  %s4 = inlined_call_operand.hbm [shape: f32[32,128], index: 4, kind: input, shape index: {}]
  %s5 = inlined_call_operand.vmem [shape: f32[16,32], index: 5, kind: input, shape index: {}]
  %s6 = inlined_call_operand.vmem [shape: f32[1,128], index: 6, kind: input, shape index: {}]
  %s7 = inlined_call_operand.hbm [shape: f32[24,128], index: 7, kind: output, shape index: {}]
  %s8 = sld [smem:[#allocation0]]
  $region50: #{tpu_custom_call.1} parent=0
    _
  %s10 = ssub.s32 1, %s8
  %s11 = scalar_select 0, %s10, %s8
  $region1: #{tpu_custom_call.1} parent=0
    #allocation2 [shape = 'u8[8192]{0}', space=vmem, size = 0x2000, scoped, tag = 'input window, operand 1, single buffered']
    #allocation3 [shape = 's32[1]{0}', space=sflag, size = 0x4, scoped, tag = 'scoped memory for tpu_custom_call.1']
    #allocation4 [shape = 's32[1]{0}', space=sflag, size = 0x4, scoped, tag = 'scoped memory for tpu_custom_call.1']
    #allocation5 [shape = 'u8[16384]{0}', space=vmem, size = 0x4000, scoped, tag = 'input window, operand 3, single buffered']
    #allocation6 [shape = 's32[1]{0}', space=sflag, size = 0x4, scoped, tag = 'scoped memory for tpu_custom_call.1']
    #allocation7 [shape = 'u8[16384]{0}', space=vmem, size = 0x4000, scoped, tag = 'input window, operand 4, single buffered']
    #allocation8 [shape = 'u8[12288]{0}', space=vmem, size = 0x3000, scoped, tag = 'output window, operand 0, single buffered']
    %12 = vsyncpa [#allocation3], 0
    %13 = vsyncpa [#allocation6], 0
    %14 = vsyncpa [#allocation4], 0
    // Predicated region
    $region2: #{tpu_custom_call.1} parent=1 // pred_check
      _
    $region3: #{tpu_custom_call.1} parent=1 // pred_check_branch
      %16 = sbr.rel (0) target = $region5
    $region4: #{tpu_custom_call.1} parent=1 // pred_region
      _
    $region5: #{tpu_custom_call.1} parent=1 // pred_fallthru
      _
    // Predicated region
    $region6: #{tpu_custom_call.1} parent=1 // pred_check
      _
    $region7: #{tpu_custom_call.1} parent=1 // pred_check_branch
      %18 = sbr.rel (0) target = $region9
    $region8: #{tpu_custom_call.1} parent=1 // pred_region
      %s20 = ssub.s32 256, 256
      %21 = vsyncadd [#allocation3], %s20
      %s22 = sshll.u32 [#allocation2], 4
      %s23 = int_to_ptr.vmem [resolvable:$true] %s22
      %28 = dma.hbm_to_vmem [thread:$0]  %s1, 256, %s23, [#allocation3], 128, 128, 8
    $region9: #{tpu_custom_call.1} parent=1 // pred_fallthru
      _
    // Predicated region
    $region10: #{tpu_custom_call.1} parent=1 // pred_check
      _
    $region11: #{tpu_custom_call.1} parent=1 // pred_check_branch
      %30 = sbr.rel (0) target = $region13
    $region12: #{tpu_custom_call.1} parent=1 // pred_region
      _
    $region13: #{tpu_custom_call.1} parent=1 // pred_fallthru
      _
    // Predicated region
    $region14: #{tpu_custom_call.1} parent=1 // pred_check
      _
    $region15: #{tpu_custom_call.1} parent=1 // pred_check_branch
      %32 = sbr.rel (0) target = $region17
    $region16: #{tpu_custom_call.1} parent=1 // pred_region
      %s34 = ssub.s32 512, 512
      %35 = vsyncadd [#allocation6], %s34
      %s36 = sshll.u32 [#allocation5], 4
      %s37 = int_to_ptr.vmem [resolvable:$true] %s36
      %42 = dma.hbm_to_vmem [thread:$0]  %s3, 512, %s37, [#allocation6], 128, 128, 8
    $region17: #{tpu_custom_call.1} parent=1 // pred_fallthru
      _
    // Predicated region
    $region18: #{tpu_custom_call.1} parent=1 // pred_check
      _
    $region19: #{tpu_custom_call.1} parent=1 // pred_check_branch
      %44 = sbr.rel (0) target = $region21
    $region20: #{tpu_custom_call.1} parent=1 // pred_region
      %s46 = ssub.s32 512, 512
      %47 = vsyncadd [#allocation6], %s46
      %s48 = sshll.u32 [#allocation7], 4
      %s49 = int_to_ptr.vmem [resolvable:$true] %s48
      %54 = dma.hbm_to_vmem [thread:$0]  %s4, 512, %s49, [#allocation6], 128, 128, 8
    $region21: #{tpu_custom_call.1} parent=1 // pred_fallthru
      _
    // Predicated region
    $region22: #{tpu_custom_call.1} parent=1 // pred_check
      _
    $region23: #{tpu_custom_call.1} parent=1 // pred_check_branch
      %56 = sbr.rel (0) target = $region25
    $region24: #{tpu_custom_call.1} parent=1 // pred_region
      _
    $region25: #{tpu_custom_call.1} parent=1 // pred_fallthru
      _
    // Predicated region
    $region26: #{tpu_custom_call.1} parent=1 // pred_check
      _
    $region27: #{tpu_custom_call.1} parent=1 // pred_check_branch
      %58 = sbr.rel (0) target = $region29
    $region28: #{tpu_custom_call.1} parent=1 // pred_region
      _
    $region29: #{tpu_custom_call.1} parent=1 // pred_fallthru
      _
    // Predicated region
    $region30: #{tpu_custom_call.1} parent=1 // pred_check
      _
    $region31: #{tpu_custom_call.1} parent=1 // pred_check_branch
      %60 = sbr.rel (0) target = $region33
    $region32: #{tpu_custom_call.1} parent=1 // pred_region
      %61 = dma.done [#allocation3], 256
    $region33: #{tpu_custom_call.1} parent=1 // pred_fallthru
      _
    // Predicated region
    $region34: #{tpu_custom_call.1} parent=1 // pred_check
      _
    $region35: #{tpu_custom_call.1} parent=1 // pred_check_branch
      %63 = sbr.rel (0) target = $region37
    $region36: #{tpu_custom_call.1} parent=1 // pred_region
      %64 = dma.done [#allocation6], 512
    $region37: #{tpu_custom_call.1} parent=1 // pred_fallthru
      _
    // Predicated region
    $region38: #{tpu_custom_call.1} parent=1 // pred_check
      _
    $region39: #{tpu_custom_call.1} parent=1 // pred_check_branch
      %66 = sbr.rel (0) target = $region41
    $region40: #{tpu_custom_call.1} parent=1 // pred_region
      %67 = dma.done [#allocation6], 512
    $region41: #{tpu_custom_call.1} parent=1 // pred_fallthru
      _
    %v68 = vld [vmem:[%s0] sm:$0xff]
    %v69 = vld [vmem:[%s0 + $0x8] sm:$0xff]
    %v70 = vld [vmem:[%s0 + $0x10] sm:$0xff]
    %v71 = vld [vmem:[#allocation2] sm:$0xff]
    %v72 = vld [vmem:[#allocation2 + $0x8] sm:$0xff]
    %v73 = vld [vmem:[%s5] sm:$0x1]
    %v74 = vlaneseq
    %v75 = vshrl.u32 %v74, 7
    %v76 = vsub.s32 0, %v75
    %v77 = vrot.slane %v73, %v76
    %vm78 = vcmask 130048
    %v80 = vsel %vm78, %v68, 0
    %v83 = vsel %vm78, %v69, 0
    %v86 = vsel %vm78, %v70, 0
    %88 = vmatprep.subr.mxu0 0.0
    %89 = vmatpush1.msra.mxu0 %v71
    %90 = vmatprep.subr.mxu0 0.0
    %91 = vmatpush1.msra.mxu0 %v72
    %92 = vmatprep.subr.mxu0 0.0
    %93 = vmatpush1.msra.mxu0 0.0
    %94 = vmatprep.subr.mxu0 0.0
    %95 = vmatpush1.msra.mxu0 0.0
    %96 = vmatprep.subr.mxu0 0.0
    %97 = vmatpush1.msra.mxu0 0.0
    %98 = vmatprep.subr.mxu0 0.0
    %99 = vmatpush1.msra.mxu0 0.0
    %100 = vmatprep.subr.mxu0 0.0
    %101 = vmatpush1.msra.mxu0 0.0
    %102 = vmatprep.subr.mxu0 0.0
    %103 = vmatpush1.msra.mxu0 0.0
    %104 = vmatprep.subr.mxu0 0.0
    %105 = vmatpush1.msra.mxu0 0.0
    %106 = vmatprep.subr.mxu0 0.0
    %107 = vmatpush1.msra.mxu0 0.0
    %108 = vmatprep.subr.mxu0 0.0
    %109 = vmatpush1.msra.mxu0 0.0
    %110 = vmatprep.subr.mxu0 0.0
    %111 = vmatpush1.msra.mxu0 0.0
    %112 = vmatprep.subr.mxu0 0.0
    %113 = vmatpush1.msra.mxu0 0.0
    %114 = vmatprep.subr.mxu0 0.0
    %115 = vmatpush1.msra.mxu0 0.0
    %116 = vmatprep.subr.mxu0 0.0
    %117 = vmatpush1.msra.mxu0 0.0
    %118 = vmatprep.subr.mxu0 0.0
    %119 = vmatpush1.msra.mxu0 0.0
    %120 = vmatprep.subr.mxu0 0.0
    %121 = vmatpush1.msra.mxu0 0.0
    %122 = vmatprep.subr.mxu0 0.0
    %123 = vmatpush1.msra.mxu0 0.0
    %124 = vmatprep.subr.mxu0 0.0
    %125 = vmatpush1.msra.mxu0 0.0
    %126 = vmatprep.subr.mxu0 0.0
    %127 = vmatpush1.msra.mxu0 0.0
    %128 = vmatprep.subr.mxu0 0.0
    %129 = vmatpush1.msra.mxu0 0.0
    %130 = vmatprep.subr.mxu0 0.0
    %131 = vmatpush1.msra.mxu0 0.0
    %132 = vmatprep.subr.mxu0 0.0
    %133 = vmatpush1.msra.mxu0 0.0
    %134 = vmatprep.subr.mxu0 0.0
    %135 = vmatpush1.msra.mxu0 0.0
    %136 = vmatprep.subr.mxu0 0.0
    %137 = vmatpush1.msra.mxu0 0.0
    %138 = vmatprep.subr.mxu0 0.0
    %139 = vmatpush1.msra.mxu0 0.0
    %140 = vmatprep.subr.mxu0 0.0
    %141 = vmatpush1.msra.mxu0 0.0
    %142 = vmatprep.subr.mxu0 0.0
    %143 = vmatpush1.msra.mxu0 0.0
    %144 = vmatprep.subr.mxu0 0.0
    %145 = vmatpush1.msra.mxu0 0.0
    %146 = vmatprep.subr.mxu0 0.0
    %147 = vmatpush1.msra.mxu0 0.0
    %148 = vmatprep.subr.mxu0 0.0
    %149 = vmatpush1.msra.mxu0 0.0
    %150 = vmatprep.subr.mxu0 0.0
    %151 = vmatpush1.msra.mxu0 0.0
    %152 = vmatprep.mubr.f32.mxu0 0.0
    %153 = vmatmul.mubr.f32.gmra.mrb[0].mxu0 %v80
    %v154 = vpop.f32.mrb[0].mxu0
    %v155 = vadd.f32 %v77, %v154
    %v156 = vpop.f32.mrb[0].mxu0
    %157 = vmatprep.mubr.f32.mxu0 0.0
    %158 = vmatmul.mubr.f32.gmra.mrb[0].mxu0 %v83
    %v159 = vpop.f32.mrb[0].mxu0
    %v160 = vadd.f32 %v77, %v159
    %v161 = vpop.f32.mrb[0].mxu0
    %162 = vmatprep.mubr.f32.mxu0 0.0
    %163 = vmatmul.mubr.f32.gmra.mrb[0].mxu0 %v86
    %v164 = vpop.f32.mrb[0].mxu0
    %v165 = vadd.f32 %v77, %v164
    %v166 = vpop.f32.mrb[0].mxu0
    %167 = vdwg.mxu0
    %v168 = vld [vmem:[%s5 + $0x1] sm:$0x1]
    %v169 = vld [vmem:[%s5 + $0x2] sm:$0x1]
    %vm170 = vcmask 261120
    %v171 = vsel %vm170, %v155, 0.0
    %172 = vadd.xlane.f32.xlu0 %v171
    %v173 = vpop.xlane.xlu0 %172
    %v174 = vsel %vm170, %v160, 0.0
    %175 = vadd.xlane.f32.xlu0 %v174
    %v176 = vpop.xlane.xlu0 %175
    %v177 = vsel %vm170, %v165, 0.0
    %178 = vadd.xlane.f32.xlu0 %v177
    %v179 = vpop.xlane.xlu0 %178
    %v180 = vrcp.pop 32.0
    %v181 = vmul.f32 %v173, %v180
    %v182 = vmul.f32 %v176, %v180
    %v183 = vmul.f32 %v179, %v180
    %v184 = vmul.f32 %v155, %v155
    %v185 = vmul.f32 %v160, %v160
    %v186 = vmul.f32 %v165, %v165
    %v187 = vsel %vm170, %v184, 0.0
    %188 = vadd.xlane.f32.xlu0 %v187
    %v189 = vpop.xlane.xlu0 %188
    %v190 = vsel %vm170, %v185, 0.0
    %191 = vadd.xlane.f32.xlu0 %v190
    %v192 = vpop.xlane.xlu0 %191
    %v193 = vsel %vm170, %v186, 0.0
    %194 = vadd.xlane.f32.xlu0 %v193
    %v195 = vpop.xlane.xlu0 %194
    %v196 = vmul.f32 %v189, %v180
    %v197 = vmul.f32 %v192, %v180
    %v198 = vmul.f32 %v195, %v180
    %v199 = vmul.f32 %v181, %v181
    %v200 = vmul.f32 %v182, %v182
    %v201 = vmul.f32 %v183, %v183
    %v202 = vsub.f32 %v196, %v199
    %v203 = vsub.f32 %v197, %v200
    %v204 = vsub.f32 %v198, %v201
    %v205 = vsub.f32 %v155, %v181
    %v206 = vsub.f32 %v160, %v182
    %v207 = vsub.f32 %v165, %v183
    %v208 = vadd.f32 %v202, 1e-05
    %v209 = vadd.f32 %v203, 1e-05
    %v210 = vadd.f32 %v204, 1e-05
    %v211 = vrsqrt.pop %v208
    %v212 = vrsqrt.pop %v209
    %v213 = vrsqrt.pop %v210
    %v214 = vmul.f32 %v205, %v211
    %v215 = vmul.f32 %v206, %v212
    %v216 = vmul.f32 %v207, %v213
    %v217 = vlaneseq
    %v218 = vshrl.u32 %v217, 7
    %v219 = vsub.s32 0, %v218
    %v220 = vrot.slane %v168, %v219
    %v221 = vmul.f32 %v214, %v220
    %v222 = vmul.f32 %v215, %v220
    %v223 = vmul.f32 %v216, %v220
    %v224 = vlaneseq
    %v225 = vshrl.u32 %v224, 7
    %v226 = vsub.s32 0, %v225
    %v227 = vrot.slane %v169, %v226
    %v228 = vadd.f32 %v221, %v227
    %v229 = vadd.f32 %v222, %v227
    %v230 = vadd.f32 %v223, %v227
    %v231 = vmul.f32 %v228, 0.5
    %v232 = vmul.f32 %v229, 0.5
    %v233 = vmul.f32 %v230, 0.5
    %v234 = vmul.f32 %v228, 0.70710677
    %v235 = vmul.f32 %v229, 0.70710677
    %v236 = vmul.f32 %v230, 0.70710677
    %v237 = verf.f32.pop %v234
    %v238 = verf.f32.pop %v235
    %v239 = verf.f32.pop %v236
    %v240 = vadd.f32 %v237, 1.0
    %v241 = vadd.f32 %v238, 1.0
    %v242 = vadd.f32 %v239, 1.0
    %v243 = vmul.f32 %v231, %v240
    %v244 = vmul.f32 %v232, %v241
    %v245 = vmul.f32 %v233, %v242
    %v246 = vld [vmem:[%s2] sm:$0xff]
    %v247 = vld [vmem:[%s2 + $0x8] sm:$0xff]
    %v248 = vld [vmem:[%s2 + $0x10] sm:$0xff]
    %v249 = vld [vmem:[%s2 + $0x18] sm:$0xff]
    %v250 = vld [vmem:[%s5 + $0x3] sm:$0x1]
    %v251 = vlaneseq
    %v252 = vshrl.u32 %v251, 7
    %v253 = vsub.s32 0, %v252
    %v254 = vrot.slane %v250, %v253
    %v256 = vsel %vm170, %v243, 0
    %v259 = vsel %vm170, %v244, 0
    %v262 = vsel %vm170, %v245, 0
    %264 = vmatprep.subr.mxu0 0.0
    %265 = vmatpush1.msra.mxu0 %v246
    %266 = vmatprep.subr.mxu0 0.0
    %267 = vmatpush1.msra.mxu0 %v247
    %268 = vmatprep.subr.mxu0 0.0
    %269 = vmatpush1.msra.mxu0 %v248
    %270 = vmatprep.subr.mxu0 0.0
    %271 = vmatpush1.msra.mxu0 %v249
    %272 = vmatprep.subr.mxu0 0.0
    %273 = vmatpush1.msra.mxu0 0.0
    %274 = vmatprep.subr.mxu0 0.0
    %275 = vmatpush1.msra.mxu0 0.0
    %276 = vmatprep.subr.mxu0 0.0
    %277 = vmatpush1.msra.mxu0 0.0
    %278 = vmatprep.subr.mxu0 0.0
    %279 = vmatpush1.msra.mxu0 0.0
    %280 = vmatprep.subr.mxu0 0.0
    %281 = vmatpush1.msra.mxu0 0.0
    %282 = vmatprep.subr.mxu0 0.0
    %283 = vmatpush1.msra.mxu0 0.0
    %284 = vmatprep.subr.mxu0 0.0
    %285 = vmatpush1.msra.mxu0 0.0
    %286 = vmatprep.subr.mxu0 0.0
    %287 = vmatpush1.msra.mxu0 0.0
    %288 = vmatprep.subr.mxu0 0.0
    %289 = vmatpush1.msra.mxu0 0.0
    %290 = vmatprep.subr.mxu0 0.0
    %291 = vmatpush1.msra.mxu0 0.0
    %292 = vmatprep.subr.mxu0 0.0
    %293 = vmatpush1.msra.mxu0 0.0
    %294 = vmatprep.subr.mxu0 0.0
    %295 = vmatpush1.msra.mxu0 0.0
    %296 = vmatprep.subr.mxu0 0.0
    %297 = vmatpush1.msra.mxu0 0.0
    %298 = vmatprep.subr.mxu0 0.0
    %299 = vmatpush1.msra.mxu0 0.0
    %300 = vmatprep.subr.mxu0 0.0
    %301 = vmatpush1.msra.mxu0 0.0
    %302 = vmatprep.subr.mxu0 0.0
    %303 = vmatpush1.msra.mxu0 0.0
    %304 = vmatprep.subr.mxu0 0.0
    %305 = vmatpush1.msra.mxu0 0.0
    %306 = vmatprep.subr.mxu0 0.0
    %307 = vmatpush1.msra.mxu0 0.0
    %308 = vmatprep.subr.mxu0 0.0
    %309 = vmatpush1.msra.mxu0 0.0
    %310 = vmatprep.subr.mxu0 0.0
    %311 = vmatpush1.msra.mxu0 0.0
    %312 = vmatprep.subr.mxu0 0.0
    %313 = vmatpush1.msra.mxu0 0.0
    %314 = vmatprep.subr.mxu0 0.0
    %315 = vmatpush1.msra.mxu0 0.0
    %316 = vmatprep.subr.mxu0 0.0
    %317 = vmatpush1.msra.mxu0 0.0
    %318 = vmatprep.subr.mxu0 0.0
    %319 = vmatpush1.msra.mxu0 0.0
    %320 = vmatprep.subr.mxu0 0.0
    %321 = vmatpush1.msra.mxu0 0.0
    %322 = vmatprep.subr.mxu0 0.0
    %323 = vmatpush1.msra.mxu0 0.0
    %324 = vmatprep.subr.mxu0 0.0
    %325 = vmatpush1.msra.mxu0 0.0
    %326 = vmatprep.subr.mxu0 0.0
    %327 = vmatpush1.msra.mxu0 0.0
    %328 = vmatprep.mubr.f32.mxu0 0.0
    %329 = vmatmul.mubr.f32.gmra.mrb[0].mxu0 %v256
    %v330 = vpop.f32.mrb[0].mxu0
    %v331 = vadd.f32 %v254, %v330
    %v332 = vpop.f32.mrb[0].mxu0
    %333 = vmatprep.mubr.f32.mxu0 0.0
    %334 = vmatmul.mubr.f32.gmra.mrb[0].mxu0 %v259
    %v335 = vpop.f32.mrb[0].mxu0
    %v336 = vadd.f32 %v254, %v335
    %v337 = vpop.f32.mrb[0].mxu0
    %338 = vmatprep.mubr.f32.mxu0 0.0
    %339 = vmatmul.mubr.f32.gmra.mrb[0].mxu0 %v262
    %v340 = vpop.f32.mrb[0].mxu0
    %v341 = vadd.f32 %v254, %v340
    %v342 = vpop.f32.mrb[0].mxu0
    %343 = vdwg.mxu0
    %v344 = vld [vmem:[%s5 + $0x4] sm:$0x1]
    %v345 = vld [vmem:[%s5 + $0x5] sm:$0x1]
    %v346 = vsel %vm170, %v331, 0.0
    %347 = vadd.xlane.f32.xlu0 %v346
    %v348 = vpop.xlane.xlu0 %347
    %v349 = vsel %vm170, %v336, 0.0
    %350 = vadd.xlane.f32.xlu0 %v349
    %v351 = vpop.xlane.xlu0 %350
    %v352 = vsel %vm170, %v341, 0.0
    %353 = vadd.xlane.f32.xlu0 %v352
    %v354 = vpop.xlane.xlu0 %353
    %v355 = vmul.f32 %v348, %v180
    %v356 = vmul.f32 %v351, %v180
    %v357 = vmul.f32 %v354, %v180
    %v358 = vmul.f32 %v331, %v331
    %v359 = vmul.f32 %v336, %v336
    %v360 = vmul.f32 %v341, %v341
    %v361 = vsel %vm170, %v358, 0.0
    %362 = vadd.xlane.f32.xlu0 %v361
    %v363 = vpop.xlane.xlu0 %362
    %v364 = vsel %vm170, %v359, 0.0
    %365 = vadd.xlane.f32.xlu0 %v364
    %v366 = vpop.xlane.xlu0 %365
    %v367 = vsel %vm170, %v360, 0.0
    %368 = vadd.xlane.f32.xlu0 %v367
    %v369 = vpop.xlane.xlu0 %368
    %v370 = vmul.f32 %v363, %v180
    %v371 = vmul.f32 %v366, %v180
    %v372 = vmul.f32 %v369, %v180
    %v373 = vmul.f32 %v355, %v355
    %v374 = vmul.f32 %v356, %v356
    %v375 = vmul.f32 %v357, %v357
    %v376 = vsub.f32 %v370, %v373
    %v377 = vsub.f32 %v371, %v374
    %v378 = vsub.f32 %v372, %v375
    %v379 = vsub.f32 %v331, %v355
    %v380 = vsub.f32 %v336, %v356
    %v381 = vsub.f32 %v341, %v357
    %v382 = vadd.f32 %v376, 1e-05
    %v383 = vadd.f32 %v377, 1e-05
    %v384 = vadd.f32 %v378, 1e-05
    %v385 = vrsqrt.pop %v382
    %v386 = vrsqrt.pop %v383
    %v387 = vrsqrt.pop %v384
    %v388 = vmul.f32 %v379, %v385
    %v389 = vmul.f32 %v380, %v386
    %v390 = vmul.f32 %v381, %v387
    %v391 = vlaneseq
    %v392 = vshrl.u32 %v391, 7
    %v393 = vsub.s32 0, %v392
    %v394 = vrot.slane %v344, %v393
    %v395 = vmul.f32 %v388, %v394
    %v396 = vmul.f32 %v389, %v394
    %v397 = vmul.f32 %v390, %v394
    %v398 = vlaneseq
    %v399 = vshrl.u32 %v398, 7
    %v400 = vsub.s32 0, %v399
    %v401 = vrot.slane %v345, %v400
    %v402 = vadd.f32 %v395, %v401
    %v403 = vadd.f32 %v396, %v401
    %v404 = vadd.f32 %v397, %v401
    %v405 = vmul.f32 %v402, 0.5
    %v406 = vmul.f32 %v403, 0.5
    %v407 = vmul.f32 %v404, 0.5
    %v408 = vmul.f32 %v402, 0.70710677
    %v409 = vmul.f32 %v403, 0.70710677
    %v410 = vmul.f32 %v404, 0.70710677
    %v411 = verf.f32.pop %v408
    %v412 = verf.f32.pop %v409
    %v413 = verf.f32.pop %v410
    %v414 = vadd.f32 %v411, 1.0
    %v415 = vadd.f32 %v412, 1.0
    %v416 = vadd.f32 %v413, 1.0
    %v417 = vmul.f32 %v405, %v414
    %v418 = vmul.f32 %v406, %v415
    %v419 = vmul.f32 %v407, %v416
    %v420 = vld [vmem:[#allocation5] sm:$0xff]
    %v421 = vld [vmem:[#allocation5 + $0x8] sm:$0xff]
    %v422 = vld [vmem:[#allocation5 + $0x10] sm:$0xff]
    %v423 = vld [vmem:[#allocation5 + $0x18] sm:$0xff]
    %v424 = vld [vmem:[%s5 + $0x6] sm:$0x1]
    %v425 = vlaneseq
    %v426 = vshrl.u32 %v425, 7
    %v427 = vsub.s32 0, %v426
    %v428 = vrot.slane %v424, %v427
    %v430 = vsel %vm170, %v417, 0
    %v433 = vsel %vm170, %v418, 0
    %v436 = vsel %vm170, %v419, 0
    %438 = vmatprep.subr.mxu0 0.0
    %439 = vmatpush1.msra.mxu0 %v420
    %440 = vmatprep.subr.mxu0 0.0
    %441 = vmatpush1.msra.mxu0 %v421
    %442 = vmatprep.subr.mxu0 0.0
    %443 = vmatpush1.msra.mxu0 %v422
    %444 = vmatprep.subr.mxu0 0.0
    %445 = vmatpush1.msra.mxu0 %v423
    %446 = vmatprep.subr.mxu0 0.0
    %447 = vmatpush1.msra.mxu0 0.0
    %448 = vmatprep.subr.mxu0 0.0
    %449 = vmatpush1.msra.mxu0 0.0
    %450 = vmatprep.subr.mxu0 0.0
    %451 = vmatpush1.msra.mxu0 0.0
    %452 = vmatprep.subr.mxu0 0.0
    %453 = vmatpush1.msra.mxu0 0.0
    %454 = vmatprep.subr.mxu0 0.0
    %455 = vmatpush1.msra.mxu0 0.0
    %456 = vmatprep.subr.mxu0 0.0
    %457 = vmatpush1.msra.mxu0 0.0
    %458 = vmatprep.subr.mxu0 0.0
    %459 = vmatpush1.msra.mxu0 0.0
    %460 = vmatprep.subr.mxu0 0.0
    %461 = vmatpush1.msra.mxu0 0.0
    %462 = vmatprep.subr.mxu0 0.0
    %463 = vmatpush1.msra.mxu0 0.0
    %464 = vmatprep.subr.mxu0 0.0
    %465 = vmatpush1.msra.mxu0 0.0
    %466 = vmatprep.subr.mxu0 0.0
    %467 = vmatpush1.msra.mxu0 0.0
    %468 = vmatprep.subr.mxu0 0.0
    %469 = vmatpush1.msra.mxu0 0.0
    %470 = vmatprep.subr.mxu0 0.0
    %471 = vmatpush1.msra.mxu0 0.0
    %472 = vmatprep.subr.mxu0 0.0
    %473 = vmatpush1.msra.mxu0 0.0
    %474 = vmatprep.subr.mxu0 0.0
    %475 = vmatpush1.msra.mxu0 0.0
    %476 = vmatprep.subr.mxu0 0.0
    %477 = vmatpush1.msra.mxu0 0.0
    %478 = vmatprep.subr.mxu0 0.0
    %479 = vmatpush1.msra.mxu0 0.0
    %480 = vmatprep.subr.mxu0 0.0
    %481 = vmatpush1.msra.mxu0 0.0
    %482 = vmatprep.subr.mxu0 0.0
    %483 = vmatpush1.msra.mxu0 0.0
    %484 = vmatprep.subr.mxu0 0.0
    %485 = vmatpush1.msra.mxu0 0.0
    %486 = vmatprep.subr.mxu0 0.0
    %487 = vmatpush1.msra.mxu0 0.0
    %488 = vmatprep.subr.mxu0 0.0
    %489 = vmatpush1.msra.mxu0 0.0
    %490 = vmatprep.subr.mxu0 0.0
    %491 = vmatpush1.msra.mxu0 0.0
    %492 = vmatprep.subr.mxu0 0.0
    %493 = vmatpush1.msra.mxu0 0.0
    %494 = vmatprep.subr.mxu0 0.0
    %495 = vmatpush1.msra.mxu0 0.0
    %496 = vmatprep.subr.mxu0 0.0
    %497 = vmatpush1.msra.mxu0 0.0
    %498 = vmatprep.subr.mxu0 0.0
    %499 = vmatpush1.msra.mxu0 0.0
    %500 = vmatprep.subr.mxu0 0.0
    %501 = vmatpush1.msra.mxu0 0.0
    %502 = vmatprep.mubr.f32.mxu0 0.0
    %503 = vmatmul.mubr.f32.gmra.mrb[0].mxu0 %v430
    %v504 = vpop.f32.mrb[0].mxu0
    %v505 = vadd.f32 %v428, %v504
    %v506 = vpop.f32.mrb[0].mxu0
    %507 = vmatprep.mubr.f32.mxu0 0.0
    %508 = vmatmul.mubr.f32.gmra.mrb[0].mxu0 %v433
    %v509 = vpop.f32.mrb[0].mxu0
    %v510 = vadd.f32 %v428, %v509
    %v511 = vpop.f32.mrb[0].mxu0
    %512 = vmatprep.mubr.f32.mxu0 0.0
    %513 = vmatmul.mubr.f32.gmra.mrb[0].mxu0 %v436
    %v514 = vpop.f32.mrb[0].mxu0
    %v515 = vadd.f32 %v428, %v514
    %v516 = vpop.f32.mrb[0].mxu0
    %517 = vdwg.mxu0
    %v518 = vld [vmem:[%s5 + $0x7] sm:$0x1]
    %v519 = vld [vmem:[%s5 + $0x8] sm:$0x1]
    %v520 = vsel %vm170, %v505, 0.0
    %521 = vadd.xlane.f32.xlu0 %v520
    %v522 = vpop.xlane.xlu0 %521
    %v523 = vsel %vm170, %v510, 0.0
    %524 = vadd.xlane.f32.xlu0 %v523
    %v525 = vpop.xlane.xlu0 %524
    %v526 = vsel %vm170, %v515, 0.0
    %527 = vadd.xlane.f32.xlu0 %v526
    %v528 = vpop.xlane.xlu0 %527
    %v529 = vmul.f32 %v522, %v180
    %v530 = vmul.f32 %v525, %v180
    %v531 = vmul.f32 %v528, %v180
    %v532 = vmul.f32 %v505, %v505
    %v533 = vmul.f32 %v510, %v510
    %v534 = vmul.f32 %v515, %v515
    %v535 = vsel %vm170, %v532, 0.0
    %536 = vadd.xlane.f32.xlu0 %v535
    %v537 = vpop.xlane.xlu0 %536
    %v538 = vsel %vm170, %v533, 0.0
    %539 = vadd.xlane.f32.xlu0 %v538
    %v540 = vpop.xlane.xlu0 %539
    %v541 = vsel %vm170, %v534, 0.0
    %542 = vadd.xlane.f32.xlu0 %v541
    %v543 = vpop.xlane.xlu0 %542
    %v544 = vmul.f32 %v537, %v180
    %v545 = vmul.f32 %v540, %v180
    %v546 = vmul.f32 %v543, %v180
    %v547 = vmul.f32 %v529, %v529
    %v548 = vmul.f32 %v530, %v530
    %v549 = vmul.f32 %v531, %v531
    %v550 = vsub.f32 %v544, %v547
    %v551 = vsub.f32 %v545, %v548
    %v552 = vsub.f32 %v546, %v549
    %v553 = vsub.f32 %v505, %v529
    %v554 = vsub.f32 %v510, %v530
    %v555 = vsub.f32 %v515, %v531
    %v556 = vadd.f32 %v550, 1e-05
    %v557 = vadd.f32 %v551, 1e-05
    %v558 = vadd.f32 %v552, 1e-05
    %v559 = vrsqrt.pop %v556
    %v560 = vrsqrt.pop %v557
    %v561 = vrsqrt.pop %v558
    %v562 = vmul.f32 %v553, %v559
    %v563 = vmul.f32 %v554, %v560
    %v564 = vmul.f32 %v555, %v561
    %v565 = vlaneseq
    %v566 = vshrl.u32 %v565, 7
    %v567 = vsub.s32 0, %v566
    %v568 = vrot.slane %v518, %v567
    %v569 = vmul.f32 %v562, %v568
    %v570 = vmul.f32 %v563, %v568
    %v571 = vmul.f32 %v564, %v568
    %v572 = vlaneseq
    %v573 = vshrl.u32 %v572, 7
    %v574 = vsub.s32 0, %v573
    %v575 = vrot.slane %v519, %v574
    %v576 = vadd.f32 %v569, %v575
    %v577 = vadd.f32 %v570, %v575
    %v578 = vadd.f32 %v571, %v575
    %v579 = vmul.f32 %v576, 0.5
    %v580 = vmul.f32 %v577, 0.5
    %v581 = vmul.f32 %v578, 0.5
    %v582 = vmul.f32 %v576, 0.70710677
    %v583 = vmul.f32 %v577, 0.70710677
    %v584 = vmul.f32 %v578, 0.70710677
    %v585 = verf.f32.pop %v582
    %v586 = verf.f32.pop %v583
    %v587 = verf.f32.pop %v584
    %v588 = vadd.f32 %v585, 1.0
    %v589 = vadd.f32 %v586, 1.0
    %v590 = vadd.f32 %v587, 1.0
    %v591 = vmul.f32 %v579, %v588
    %v592 = vmul.f32 %v580, %v589
    %v593 = vmul.f32 %v581, %v590
    %v594 = vld [vmem:[#allocation7] sm:$0xff]
    %v595 = vld [vmem:[#allocation7 + $0x8] sm:$0xff]
    %v596 = vld [vmem:[#allocation7 + $0x10] sm:$0xff]
    %v597 = vld [vmem:[#allocation7 + $0x18] sm:$0xff]
    %v598 = vld [vmem:[%s6] sm:$0x1]
    %v600 = vlaneseq
    %v601 = vshrl.u32 %v600, 7
    %v602 = vsub.s32 0, %v601
    %v603 = vrot.slane %v598, %v602
    %v606 = vsel %vm170, %v591, 0
    %v609 = vsel %vm170, %v592, 0
    %v612 = vsel %vm170, %v593, 0
    %614 = vmatprep.subr.mxu0 0.0
    %615 = vmatpush1.msra.mxu0 %v594
    %616 = vmatprep.subr.mxu0 0.0
    %617 = vmatpush1.msra.mxu0 %v595
    %618 = vmatprep.subr.mxu0 0.0
    %619 = vmatpush1.msra.mxu0 %v596
    %620 = vmatprep.subr.mxu0 0.0
    %621 = vmatpush1.msra.mxu0 %v597
    %622 = vmatprep.subr.mxu0 0.0
    %623 = vmatpush1.msra.mxu0 0.0
    %624 = vmatprep.subr.mxu0 0.0
    %625 = vmatpush1.msra.mxu0 0.0
    %626 = vmatprep.subr.mxu0 0.0
    %627 = vmatpush1.msra.mxu0 0.0
    %628 = vmatprep.subr.mxu0 0.0
    %629 = vmatpush1.msra.mxu0 0.0
    %630 = vmatprep.subr.mxu0 0.0
    %631 = vmatpush1.msra.mxu0 0.0
    %632 = vmatprep.subr.mxu0 0.0
    %633 = vmatpush1.msra.mxu0 0.0
    %634 = vmatprep.subr.mxu0 0.0
    %635 = vmatpush1.msra.mxu0 0.0
    %636 = vmatprep.subr.mxu0 0.0
    %637 = vmatpush1.msra.mxu0 0.0
    %638 = vmatprep.subr.mxu0 0.0
    %639 = vmatpush1.msra.mxu0 0.0
    %640 = vmatprep.subr.mxu0 0.0
    %641 = vmatpush1.msra.mxu0 0.0
    %642 = vmatprep.subr.mxu0 0.0
    %643 = vmatpush1.msra.mxu0 0.0
    %644 = vmatprep.subr.mxu0 0.0
    %645 = vmatpush1.msra.mxu0 0.0
    %646 = vmatprep.subr.mxu0 0.0
    %647 = vmatpush1.msra.mxu0 0.0
    %648 = vmatprep.subr.mxu0 0.0
    %649 = vmatpush1.msra.mxu0 0.0
    %650 = vmatprep.subr.mxu0 0.0
    %651 = vmatpush1.msra.mxu0 0.0
    %652 = vmatprep.subr.mxu0 0.0
    %653 = vmatpush1.msra.mxu0 0.0
    %654 = vmatprep.subr.mxu0 0.0
    %655 = vmatpush1.msra.mxu0 0.0
    %656 = vmatprep.subr.mxu0 0.0
    %657 = vmatpush1.msra.mxu0 0.0
    %658 = vmatprep.subr.mxu0 0.0
    %659 = vmatpush1.msra.mxu0 0.0
    %660 = vmatprep.subr.mxu0 0.0
    %661 = vmatpush1.msra.mxu0 0.0
    %662 = vmatprep.subr.mxu0 0.0
    %663 = vmatpush1.msra.mxu0 0.0
    %664 = vmatprep.subr.mxu0 0.0
    %665 = vmatpush1.msra.mxu0 0.0
    %666 = vmatprep.subr.mxu0 0.0
    %667 = vmatpush1.msra.mxu0 0.0
    %668 = vmatprep.subr.mxu0 0.0
    %669 = vmatpush1.msra.mxu0 0.0
    %670 = vmatprep.subr.mxu0 0.0
    %671 = vmatpush1.msra.mxu0 0.0
    %672 = vmatprep.subr.mxu0 0.0
    %673 = vmatpush1.msra.mxu0 0.0
    %674 = vmatprep.subr.mxu0 0.0
    %675 = vmatpush1.msra.mxu0 0.0
    %676 = vmatprep.subr.mxu0 0.0
    %677 = vmatpush1.msra.mxu0 0.0
    %678 = vmatprep.mubr.f32.mxu0 0.0
    %679 = vmatmul.mubr.f32.gmra.mrb[0].mxu0 %v606
    %v680 = vpop.f32.mrb[0].mxu0
    %v681 = vadd.f32 %v603, %v680
    %v682 = vpop.f32.mrb[0].mxu0
    %683 = vmatprep.mubr.f32.mxu0 0.0
    %684 = vmatmul.mubr.f32.gmra.mrb[0].mxu0 %v609
    %v685 = vpop.f32.mrb[0].mxu0
    %v686 = vadd.f32 %v603, %v685
    %v687 = vpop.f32.mrb[0].mxu0
    %688 = vmatprep.mubr.f32.mxu0 0.0
    %689 = vmatmul.mubr.f32.gmra.mrb[0].mxu0 %v612
    %v690 = vpop.f32.mrb[0].mxu0
    %v691 = vadd.f32 %v603, %v690
    %v692 = vpop.f32.mrb[0].mxu0
    %693 = vdwg.mxu0
    %v694 = vtanh.pop %v681
    %v695 = vtanh.pop %v686
    %v696 = vtanh.pop %v691
    %697 = vst [vmem:[#allocation8] sm:$0xff] %v694
    %698 = vst [vmem:[#allocation8 + $0x8] sm:$0xff] %v695
    %699 = vst [vmem:[#allocation8 + $0x10] sm:$0xff] %v696
    // Predicated region
    $region42: #{tpu_custom_call.1} parent=1 // pred_check
      _
    $region43: #{tpu_custom_call.1} parent=1 // pred_check_branch
      %701 = sbr.rel (0) target = $region45
    $region44: #{tpu_custom_call.1} parent=1 // pred_region
      %s703 = ssub.s32 384, 384
      %704 = vsyncadd [#allocation4], %s703
      %s705 = sshll.u32 [#allocation8], 4
      %s706 = int_to_ptr.vmem [resolvable:$true] %s705
      %711 = dma.vmem_to_hbm [thread:$0]  %s706, 384, %s7, [#allocation4], 128, 128, 8
    $region45: #{tpu_custom_call.1} parent=1 // pred_fallthru
      _
    // Predicated region
    $region46: #{tpu_custom_call.1} parent=1 // pred_check
      _
    $region47: #{tpu_custom_call.1} parent=1 // pred_check_branch
      %713 = sbr.rel (0) target = $region49
    $region48: #{tpu_custom_call.1} parent=1 // pred_region
      %714 = dma.done [#allocation4], 384
    $region49: #{tpu_custom_call.1} parent=1 // pred_fallthru
      _
    %715 = vsyncpa [#allocation3], 1
    %716 = vsyncpa [#allocation6], 1
    %717 = vsyncpa [#allocation4], 1

</llo_original>
